<compile_context>
chip_gen: v7x
topology: tpu7x:2x2x1
jax: 0.10.0
libtpu: 0.0.40
codegen_flags: <defaults>
</compile_context>

<pallas_src>
import functools

import jax
import jax.numpy as jnp
from jax import lax
from jax.experimental import pallas as pl
from jax.experimental.pallas import tpu as pltpu


def _global_perceptron_kernel(x_ref, w1_ref, b1_ref, w2_ref, b2_ref, o_ref,
                              acc_ref, *, hw_total, thw, mask_last_tile):
    """Grid = (N_tiles, HW_tiles); HW axis is the (last, 'arbitrary') reduction axis.

    x_ref:   (tn, C, thw)  native-dtype tile of the activations
    w1_ref:  (C, internal) f32        b1_ref: (1, internal) f32
    w2_ref:  (internal, C) f32        b2_ref: (1, C) f32
    o_ref:   (tn, C) f32 output block (resident across the HW axis)
    acc_ref: (tn, C) f32 scratch accumulator (pooled sum)
    """
    k = pl.program_id(1)

    @pl.when(k == 0)
    def _init():
        acc_ref[...] = jnp.zeros_like(acc_ref)

    # Stream one (tn, C, thw) chunk; cast to f32 in-register, accumulate in f32.
    chunk = x_ref[...].astype(jnp.float32)
    if mask_last_tile:
        # Last HW tile may overhang the real H*W extent: zero the padded lanes.
        pos = k * thw + lax.broadcasted_iota(jnp.int32, chunk.shape, 2)
        chunk = jnp.where(pos < hw_total, chunk, 0.0)
    # One lane-reduction (XLU) per chunk; VPU add into the resident accumulator.
    acc_ref[...] += jnp.sum(chunk, axis=-1)

    # Epilogue: run the tiny FC -> ReLU -> FC -> sigmoid exactly once, at the final
    # HW step, and write the output block a single time (no per-step stores).
    @pl.when(k == pl.num_programs(1) - 1)
    def _finalize():
        pooled = acc_ref[...] * (1.0 / float(hw_total))       # mean over the TRUE H*W
        h = jnp.dot(pooled, w1_ref[...],
                    preferred_element_type=jnp.float32) + b1_ref[...]
        h = jnp.maximum(h, 0.0)                                # ReLU
        y = jnp.dot(h, w2_ref[...],
                    preferred_element_type=jnp.float32) + b2_ref[...]
        o_ref[...] = jax.nn.sigmoid(y).astype(o_ref.dtype)     # sigmoid on the EUP


def _pick_tiles(n, c, hw, itemsize, budget_bytes=4 << 20):
    """Pick (tn, thw) so the streamed (tn, C, thw) tile stays within `budget_bytes`.

    thw must be a multiple of 128 or equal the full H*W extent; tn must be a
    multiple of 8 or equal the full N extent (BlockSpec (8,128) rule).
    """
    # --- HW (lane) tile ---------------------------------------------------
    if hw <= 1024:
        thw = hw                                   # full extent: always legal
    else:
        per_lane = max(1, 8 * c * itemsize)        # bytes per lane-column at tn=8
        cap = (budget_bytes // per_lane) // 128 * 128
        cap = int(min(max(cap, 128), 8192))
        thw = hw if hw <= cap else cap
    # --- N (batch) tile -----------------------------------------------------
    if n <= 8:
        tn = n                                     # full extent: always legal
    else:
        per_row = max(1, c * thw * itemsize)
        tn_budget = (budget_bytes // per_row) // 8 * 8
        tn = int(min(max(tn_budget, 8), 128, (n // 8) * 8))
    return tn, thw


def global_perceptron(x_nchw, w1, b1, w2, b2):
    """x_nchw: (N, C, H, W) any float dtype; w1: (C, internal); b1: (internal,);
    w2: (internal, C); b2: (C,). Returns (N, C, 1, 1) float32."""
    n, c, h, w = x_nchw.shape
    hw = h * w
    internal = w1.shape[1]

    # Reshape is free; do NOT pre-cast the activations (stream native dtype).
    x3 = x_nchw.reshape(n, c, hw)
    w1f = w1.astype(jnp.float32)
    w2f = w2.astype(jnp.float32)
    b1_2d = b1.reshape(1, internal).astype(jnp.float32)
    b2_2d = b2.reshape(1, c).astype(jnp.float32)

    itemsize = jnp.dtype(x3.dtype).itemsize
    tn, thw = _pick_tiles(n, c, hw, itemsize)
    mask_last_tile = (hw % thw) != 0
    grid = (pl.cdiv(n, tn), pl.cdiv(hw, thw))

    cost = pl.CostEstimate(
        flops=n * c * hw + 4 * n * c * internal,          # pooling adds + 2 tiny matmuls
        transcendentals=n * c,                            # sigmoid
        bytes_accessed=n * c * hw * itemsize
        + (2 * c * internal + internal + c) * 4
        + n * c * 4,
    )

    # Approximate VMEM footprint: double-buffered input tile + params + out + scratch.
    x_tile_bytes = tn * c * thw * itemsize
    approx_vmem = (2 * x_tile_bytes
                   + 2 * 4 * (2 * c * internal + internal + c)
                   + 3 * tn * c * 4)
    compiler_kwargs = dict(dimension_semantics=("parallel", "arbitrary"))
    if approx_vmem > (12 << 20):
        # Only raise the scoped-VMEM limit when the footprint actually needs it
        # (keeps the default behaviour on v5e's smaller 16 MiB default otherwise).
        compiler_kwargs["vmem_limit_bytes"] = int(min(48 << 20, approx_vmem + (8 << 20)))

    kernel = functools.partial(
        _global_perceptron_kernel,
        hw_total=hw, thw=thw, mask_last_tile=mask_last_tile,
    )

    out = pl.pallas_call(
        kernel,
        out_shape=jax.ShapeDtypeStruct((n, c), jnp.float32),
        grid_spec=pltpu.PrefetchScalarGridSpec(
            num_scalar_prefetch=0,
            grid=grid,
            in_specs=[
                # Streamed activations: block index (i, 0, k).
                pl.BlockSpec((tn, c, thw), lambda i, k: (i, 0, k)),
                # Tiny parameters: full-extent blocks, constant index map.
                pl.BlockSpec((c, internal), lambda i, k: (0, 0)),
                pl.BlockSpec((1, internal), lambda i, k: (0, 0)),
                pl.BlockSpec((internal, c), lambda i, k: (0, 0)),
                pl.BlockSpec((1, c), lambda i, k: (0, 0)),
            ],
            # Same output block across the HW axis => accumulator-resident output.
            out_specs=pl.BlockSpec((tn, c), lambda i, k: (i, 0)),
            scratch_shapes=[pltpu.VMEM((tn, c), jnp.float32)],
        ),
        compiler_params=pltpu.CompilerParams(**compiler_kwargs),
        cost_estimate=cost,
    )(x3, w1f, b1_2d, w2f, b2_2d)

    # match PyTorch's x.view(-1, C, 1, 1)
    return out.reshape(n, c, 1, 1)


if __name__ == "__main__":
    # Small shapes consistent with the module: N=2, C=4, H=W=16, internal=8.
    N, C, H, W = 2, 4, 16, 16
    INTERNAL = 8

    key = jax.random.PRNGKey(0)
    kx, kw1, kb1, kw2, kb2 = jax.random.split(key, 5)

    x = jax.random.normal(kx, (N, C, H, W), dtype=jnp.float32)

    # Deterministic synthetic parameters (Conv2d 1x1 weights in matmul form):
    # PyTorch fc1.weight (internal, C, 1, 1) is stored transposed as (C, internal)
    # so the kernel computes pooled @ w1; likewise fc2.weight -> (internal, C).
    w1 = jax.random.normal(kw1, (C, INTERNAL), dtype=jnp.float32) * 0.1
    b1 = jax.random.normal(kb1, (INTERNAL,), dtype=jnp.float32) * 0.1
    w2 = jax.random.normal(kw2, (INTERNAL, C), dtype=jnp.float32) * 0.1
    b2 = jax.random.normal(kb2, (C,), dtype=jnp.float32) * 0.1

    out = global_perceptron(x, w1, b1, w2, b2)
    out = jax.block_until_ready(out)

    # Pure-JAX reference check of the same math.
    pooled = jnp.mean(x.reshape(N, C, H * W), axis=-1)
    ref = jax.nn.sigmoid(
        jnp.maximum(pooled @ w1 + b1, 0.0) @ w2 + b2
    ).reshape(N, C, 1, 1)
    assert out.shape == (N, C, 1, 1)
    assert jnp.allclose(out, ref, atol=1e-5, rtol=1e-5)

    print("KERNEL_OK")
</pallas_src>

<mosaic_0001>
module attributes {stable_mosaic.version = 11 : i64} {
  func.func @_global_perceptron_kernel(%arg0: i32, %arg1: i32, %arg2: memref<2x4x256xf32, #tpu.memory_space<vmem>>, %arg3: memref<4x8xf32, #tpu.memory_space<vmem>>, %arg4: memref<1x8xf32, #tpu.memory_space<vmem>>, %arg5: memref<8x4xf32, #tpu.memory_space<vmem>>, %arg6: memref<1x4xf32, #tpu.memory_space<vmem>>, %arg7: memref<2x4xf32, #tpu.memory_space<vmem>>, %arg8: memref<2x4xf32, #tpu.memory_space<vmem>>) attributes {dimension_semantics = [#tpu.dimension_semantics<parallel>, #tpu.dimension_semantics<arbitrary>], iteration_bounds = array<i64: 1, 1>, scalar_prefetch = 0 : i64, scratch_operands = 1 : i64, tpu.core_type = #tpu.core_type<tc>, window_params = [{transform_indices = @transform_0, window_bounds = array<i64: 2, 4, 256>}, {pipeline_mode = #tpu.pipeline_mode<synchronous>, transform_indices = @transform_1, window_bounds = array<i64: 4, 8>}, {pipeline_mode = #tpu.pipeline_mode<synchronous>, transform_indices = @transform_2, window_bounds = array<i64: 1, 8>}, {pipeline_mode = #tpu.pipeline_mode<synchronous>, transform_indices = @transform_3, window_bounds = array<i64: 8, 4>}, {pipeline_mode = #tpu.pipeline_mode<synchronous>, transform_indices = @transform_4, window_bounds = array<i64: 1, 4>}, {transform_indices = @transform_5, window_bounds = array<i64: 2, 4>}]} {
    %c0_i32 = arith.constant 0 : i32
    %0 = arith.cmpi eq, %arg1, %c0_i32 : i32
    %1 = arith.extui %0 : i1 to i32
    %c0_i32_0 = arith.constant 0 : i32
    %2 = arith.cmpi ne, %1, %c0_i32_0 : i32
    scf.if %2 {
      %cst_9 = arith.constant 0.000000e+00 : f32
      %11 = vector.broadcast %cst_9 : f32 to vector<2x4xf32>
      %c0_10 = arith.constant 0 : index
      %c0_11 = arith.constant 0 : index
      %12 = vector.load %arg8[%c0_10, %c0_11] : memref<2x4xf32, #tpu.memory_space<vmem>>, vector<2x4xf32>
      tpu.vector_store %arg8[%c0_10, %c0_11], %11 {strides = array<i32>} : memref<2x4xf32, #tpu.memory_space<vmem>>, vector<2x4xf32>,
    } else {
    }
    %c0 = arith.constant 0 : index
    %c0_1 = arith.constant 0 : index
    %c0_2 = arith.constant 0 : index
    %3 = vector.load %arg2[%c0, %c0_1, %c0_2] : memref<2x4x256xf32, #tpu.memory_space<vmem>>, vector<2x4x256xf32>
    %c0_3 = arith.constant 0 : index
    %c0_4 = arith.constant 0 : index
    %4 = vector.load %arg8[%c0_3, %c0_4] : memref<2x4xf32, #tpu.memory_space<vmem>>, vector<2x4xf32>
    %cst = arith.constant dense<0.000000e+00> : vector<2x4xf32>
    %5 = vector.multi_reduction <add>, %3, %cst [2] : vector<2x4x256xf32> to vector<2x4xf32>
    %6 = arith.addf %4, %5 : vector<2x4xf32>
    %c0_5 = arith.constant 0 : index
    %c0_6 = arith.constant 0 : index
    %7 = vector.load %arg8[%c0_5, %c0_6] : memref<2x4xf32, #tpu.memory_space<vmem>>, vector<2x4xf32>
    tpu.vector_store %arg8[%c0_5, %c0_6], %6 {strides = array<i32>} : memref<2x4xf32, #tpu.memory_space<vmem>>, vector<2x4xf32>,
    %c0_i32_7 = arith.constant 0 : i32
    %8 = arith.cmpi eq, %arg1, %c0_i32_7 : i32
    %9 = arith.extui %8 : i1 to i32
    %c0_i32_8 = arith.constant 0 : i32
    %10 = arith.cmpi ne, %9, %c0_i32_8 : i32
    scf.if %10 {
      %c0_9 = arith.constant 0 : index
      %c0_10 = arith.constant 0 : index
      %11 = vector.load %arg8[%c0_9, %c0_10] : memref<2x4xf32, #tpu.memory_space<vmem>>, vector<2x4xf32>
      %cst_11 = arith.constant 3.906250e-03 : f32
      %12 = vector.broadcast %cst_11 : f32 to vector<2x4xf32>
      %13 = arith.mulf %11, %12 : vector<2x4xf32>
      %c0_12 = arith.constant 0 : index
      %c0_13 = arith.constant 0 : index
      %14 = vector.load %arg3[%c0_12, %c0_13] : memref<4x8xf32, #tpu.memory_space<vmem>>, vector<4x8xf32>
      %cst_14 = arith.constant dense<0.000000e+00> : vector<2x8xf32>
      %15 = tpu.matmul %13, %14, %cst_14 {dimension_numbers = #tpu.dot_dimension_numbers<[1], [0], [0], [1], [0, 0, 1, 1], [], []>} : vector<2x4xf32>, vector<4x8xf32>, vector<2x8xf32> -> vector<2x8xf32>
      %c0_15 = arith.constant 0 : index
      %c0_16 = arith.constant 0 : index
      %16 = vector.load %arg4[%c0_15, %c0_16] : memref<1x8xf32, #tpu.memory_space<vmem>>, vector<1x8xf32>
      %17 = vector.broadcast %16 : vector<1x8xf32> to vector<2x8xf32>
      %18 = arith.addf %15, %17 : vector<2x8xf32>
      %cst_17 = arith.constant 0.000000e+00 : f32
      %19 = vector.broadcast %cst_17 : f32 to vector<2x8xf32>
      %20 = arith.maximumf %18, %19 : vector<2x8xf32>
      %c0_18 = arith.constant 0 : index
      %c0_19 = arith.constant 0 : index
      %21 = vector.load %arg5[%c0_18, %c0_19] : memref<8x4xf32, #tpu.memory_space<vmem>>, vector<8x4xf32>
      %cst_20 = arith.constant dense<0.000000e+00> : vector<2x4xf32>
      %22 = tpu.matmul %20, %21, %cst_20 {dimension_numbers = #tpu.dot_dimension_numbers<[1], [0], [0], [1], [0, 0, 1, 1], [], []>} : vector<2x8xf32>, vector<8x4xf32>, vector<2x4xf32> -> vector<2x4xf32>
      %c0_21 = arith.constant 0 : index
      %c0_22 = arith.constant 0 : index
      %23 = vector.load %arg6[%c0_21, %c0_22] : memref<1x4xf32, #tpu.memory_space<vmem>>, vector<1x4xf32>
      %24 = vector.broadcast %23 : vector<1x4xf32> to vector<2x4xf32>
      %25 = arith.addf %22, %24 : vector<2x4xf32>
      %26 = arith.negf %25 : vector<2x4xf32>
      %27 = math.exp %26 : vector<2x4xf32>
      %cst_23 = arith.constant 1.000000e+00 : f32
      %28 = vector.broadcast %cst_23 : f32 to vector<2x4xf32>
      %29 = arith.addf %28, %27 : vector<2x4xf32>
      %30 = arith.divf %28, %29 : vector<2x4xf32>
      %c0_24 = arith.constant 0 : index
      %c0_25 = arith.constant 0 : index
      %31 = vector.load %arg7[%c0_24, %c0_25] : memref<2x4xf32, #tpu.memory_space<vmem>>, vector<2x4xf32>
      tpu.vector_store %arg7[%c0_24, %c0_25], %30 {strides = array<i32>} : memref<2x4xf32, #tpu.memory_space<vmem>>, vector<2x4xf32>,
    } else {
    }
    return
  }
  func.func @transform_0(%arg0: i32, %arg1: i32) -> (i32, i32, i32) {
    %c0_i32 = arith.constant 0 : i32
    %c0_i32_0 = arith.constant 0 : i32
    return %arg0, %c0_i32, %arg1 : i32, i32, i32
  }
  func.func @transform_1(%arg0: i32, %arg1: i32) -> (i32, i32) {
    %c0_i32 = arith.constant 0 : i32
    %c0_i32_0 = arith.constant 0 : i32
    %c0_i32_1 = arith.constant 0 : i32
    return %c0_i32, %c0_i32_0 : i32, i32
  }
  func.func @transform_2(%arg0: i32, %arg1: i32) -> (i32, i32) {
    %c0_i32 = arith.constant 0 : i32
    %c0_i32_0 = arith.constant 0 : i32
    %c0_i32_1 = arith.constant 0 : i32
    return %c0_i32, %c0_i32_0 : i32, i32
  }
  func.func @transform_3(%arg0: i32, %arg1: i32) -> (i32, i32) {
    %c0_i32 = arith.constant 0 : i32
    %c0_i32_0 = arith.constant 0 : i32
    %c0_i32_1 = arith.constant 0 : i32
    return %c0_i32, %c0_i32_0 : i32, i32
  }
  func.func @transform_4(%arg0: i32, %arg1: i32) -> (i32, i32) {
    %c0_i32 = arith.constant 0 : i32
    %c0_i32_0 = arith.constant 0 : i32
    %c0_i32_1 = arith.constant 0 : i32
    return %c0_i32, %c0_i32_0 : i32, i32
  }
  func.func @transform_5(%arg0: i32, %arg1: i32) -> (i32, i32) {
    %c0_i32 = arith.constant 0 : i32
    %c0_i32_0 = arith.constant 0 : i32
    return %arg0, %c0_i32 : i32, i32
  }
}

</mosaic_0001>

<llo_original>
// kernel: tpu_custom_call.1
$region0: #{tpu_custom_call.1}
  #allocation0 [shape = 'u32[]', space=smem, size = 0x4, offset = 0x4, fixed_abs, tag = 'smem constant byte address 0x4 - core index']
  #allocation1 [shape = 'u32[144,128]{1,0:T(1,128)}', space=vmem, size = 0x12000, scoped, tag = 'internal scratch']
  #allocation2 [shape = 'f32[2,4]{1,0:T(2,128)}', space=vmem, size = 0x400, scoped, tag = 'scratch operand']
  %s0 = inlined_call_operand.hbm [shape: f32[2,4,256], index: 0, kind: input, shape index: {}]
  %s1 = inlined_call_operand.vmem [shape: f32[4,8], index: 1, kind: input, shape index: {}]
  %s2 = inlined_call_operand.vmem [shape: f32[1,8], index: 2, kind: input, shape index: {}]
  %s3 = inlined_call_operand.vmem [shape: f32[8,4], index: 3, kind: input, shape index: {}]
  %s4 = inlined_call_operand.vmem [shape: f32[1,4], index: 4, kind: input, shape index: {}]
  %s5 = inlined_call_operand.hbm [shape: f32[2,4], index: 5, kind: output, shape index: {}]
  %s6 = sld [smem:[#allocation0]]
  $region42: #{tpu_custom_call.1} parent=0
    _
  %s8 = ssub.s32 1, %s6
  %s9 = scalar_select 0, %s8, %s6
  $region1: #{tpu_custom_call.1} parent=0
    #allocation3 [shape = 'u8[8192]{0}', space=vmem, size = 0x2000, scoped, tag = 'input window, operand 0, single buffered']
    #allocation4 [shape = 's32[1]{0}', space=sflag, size = 0x4, scoped, tag = 'scoped memory for tpu_custom_call.1']
    #allocation5 [shape = 's32[1]{0}', space=sflag, size = 0x4, scoped, tag = 'scoped memory for tpu_custom_call.1']
    #allocation6 [shape = 'u8[1024]{0}', space=vmem, size = 0x400, scoped, tag = 'output window, operand 0, single buffered']
    %10 = vsyncpa [#allocation4], 0
    %11 = vsyncpa [#allocation5], 0
    // Predicated region
    $region2: #{tpu_custom_call.1} parent=1 // pred_check
      _
    $region3: #{tpu_custom_call.1} parent=1 // pred_check_branch
      %13 = sbr.rel (0) target = $region5
    $region4: #{tpu_custom_call.1} parent=1 // pred_region
      %s15 = ssub.s32 256, 256
      %16 = vsyncadd [#allocation4], %s15
      %s17 = sshll.u32 [#allocation3], 4
      %s18 = int_to_ptr.vmem [resolvable:$true] %s17
      %23 = dma.hbm_to_vmem [thread:$0]  %s0, 256, %s18, [#allocation4], 128, 128, 8
    $region5: #{tpu_custom_call.1} parent=1 // pred_fallthru
      _
    // Predicated region
    $region6: #{tpu_custom_call.1} parent=1 // pred_check
      _
    $region7: #{tpu_custom_call.1} parent=1 // pred_check_branch
      %25 = sbr.rel (0) target = $region9
    $region8: #{tpu_custom_call.1} parent=1 // pred_region
      _
    $region9: #{tpu_custom_call.1} parent=1 // pred_fallthru
      _
    // Predicated region
    $region10: #{tpu_custom_call.1} parent=1 // pred_check
      _
    $region11: #{tpu_custom_call.1} parent=1 // pred_check_branch
      %27 = sbr.rel (0) target = $region13
    $region12: #{tpu_custom_call.1} parent=1 // pred_region
      _
    $region13: #{tpu_custom_call.1} parent=1 // pred_fallthru
      _
    // Predicated region
    $region14: #{tpu_custom_call.1} parent=1 // pred_check
      _
    $region15: #{tpu_custom_call.1} parent=1 // pred_check_branch
      %29 = sbr.rel (0) target = $region17
    $region16: #{tpu_custom_call.1} parent=1 // pred_region
      _
    $region17: #{tpu_custom_call.1} parent=1 // pred_fallthru
      _
    // Predicated region
    $region18: #{tpu_custom_call.1} parent=1 // pred_check
      _
    $region19: #{tpu_custom_call.1} parent=1 // pred_check_branch
      %31 = sbr.rel (0) target = $region21
    $region20: #{tpu_custom_call.1} parent=1 // pred_region
      _
    $region21: #{tpu_custom_call.1} parent=1 // pred_fallthru
      _
    // Predicated region
    $region22: #{tpu_custom_call.1} parent=1 // pred_check
      _
    $region23: #{tpu_custom_call.1} parent=1 // pred_check_branch
      %33 = sbr.rel (0) target = $region25
    $region24: #{tpu_custom_call.1} parent=1 // pred_region
      %34 = dma.done [#allocation4], 256
    $region25: #{tpu_custom_call.1} parent=1 // pred_fallthru
      _
    %p35 = scmp.eq.s32.totalorder 0, 0
    // Predicated region
    $region26: #{tpu_custom_call.1} parent=1 // pred_check
      %p36 = pneg %p35
    $region27: #{tpu_custom_call.1} parent=1 // pred_check_branch
      %38 = sbr.rel (%p36) target = $region29
    $region28: #{tpu_custom_call.1} parent=1 // pred_region
      %vm39 = vcmask 25600
      %40 = vst.msk [vmem:[#allocation2] sm:$0x3] %vm39, 0.0
    $region29: #{tpu_custom_call.1} parent=1 // pred_fallthru
      _
    %v41 = vld [vmem:[#allocation3] sm:$0xff]
    %v42 = vld [vmem:[#allocation3 + $0x8] sm:$0xff]
    %v43 = vld [vmem:[#allocation2] sm:$0x3]
    %v46 = vcombine.high %v41, %v41
    %v47 = vcombine.high %v42, %v42
    %vm50 = vcmask 1043456
    %v51 = vsel %vm50, %v41, 0.0
    %v52 = vsel %vm50, %v46, 0.0
    %v53 = vadd.f32 %v51, %v52
    %54 = vadd.xlane.f32.xlu0 %v53
    %v55 = vpop.xlane.xlu0 %54
    %v56 = vsel %vm50, %v42, 0.0
    %v57 = vsel %vm50, %v47, 0.0
    %v58 = vadd.f32 %v56, %v57
    %59 = vadd.xlane.f32.xlu0 %v58
    %v60 = vpop.xlane.xlu0 %59
    %v63 = vlaneseq
    %v64 = vand.u32 %v63, 127
    %v65 = vlaneseq
    %v66 = vshrl.u32 %v65, 7
    %v67 = vsub.s32 %v64, %v66
    %v68 = vrot.slane %v55, %v67
    %v69 = vlaneseq
    %v70 = vshrl.u32 %v69, 7
    %v71 = vsub.s32 %v64, %v70
    %v72 = vrot.slane %v60, %v71
    %vm73 = vcmask 1041409
    %v74 = vsel %vm73, %v72, %v68
    %v76 = vadd.f32 %v43, %v74
    %vm77 = vcmask 25600
    %78 = vst.msk [vmem:[#allocation2] sm:$0x3] %vm77, %v76
    // Predicated region
    $region30: #{tpu_custom_call.1} parent=1 // pred_check
      %p79 = pneg %p35
    $region31: #{tpu_custom_call.1} parent=1 // pred_check_branch
      %81 = sbr.rel (%p79) target = $region33
    $region32: #{tpu_custom_call.1} parent=1 // pred_region
      %v82 = vld [vmem:[#allocation2] sm:$0x3]
      %v83 = vmul.f32 %v82, 0.00390625
      %v84 = vld [vmem:[%s1] sm:$0xf]
      %v85 = vld [vmem:[%s2] sm:$0x1]
      %v87 = vlaneseq
      %v88 = vshrl.u32 %v87, 7
      %v89 = vsub.s32 0, %v88
      %v90 = vrot.slane %v85, %v89
      %vm92 = vcmask 31744
      %v94 = vsel %vm92, %v83, 0
      %v97 = vsel %vm50, %v84, 0
      %99 = vmatprep.subr.mxu0 0.0
      %100 = vmatpush1.msra.mxu0 %v97
      %101 = vmatprep.subr.mxu0 0.0
      %102 = vmatpush1.msra.mxu0 0.0
      %103 = vmatprep.subr.mxu0 0.0
      %104 = vmatpush1.msra.mxu0 0.0
      %105 = vmatprep.subr.mxu0 0.0
      %106 = vmatpush1.msra.mxu0 0.0
      %107 = vmatprep.subr.mxu0 0.0
      %108 = vmatpush1.msra.mxu0 0.0
      %109 = vmatprep.subr.mxu0 0.0
      %110 = vmatpush1.msra.mxu0 0.0
      %111 = vmatprep.subr.mxu0 0.0
      %112 = vmatpush1.msra.mxu0 0.0
      %113 = vmatprep.subr.mxu0 0.0
      %114 = vmatpush1.msra.mxu0 0.0
      %115 = vmatprep.subr.mxu0 0.0
      %116 = vmatpush1.msra.mxu0 0.0
      %117 = vmatprep.subr.mxu0 0.0
      %118 = vmatpush1.msra.mxu0 0.0
      %119 = vmatprep.subr.mxu0 0.0
      %120 = vmatpush1.msra.mxu0 0.0
      %121 = vmatprep.subr.mxu0 0.0
      %122 = vmatpush1.msra.mxu0 0.0
      %123 = vmatprep.subr.mxu0 0.0
      %124 = vmatpush1.msra.mxu0 0.0
      %125 = vmatprep.subr.mxu0 0.0
      %126 = vmatpush1.msra.mxu0 0.0
      %127 = vmatprep.subr.mxu0 0.0
      %128 = vmatpush1.msra.mxu0 0.0
      %129 = vmatprep.subr.mxu0 0.0
      %130 = vmatpush1.msra.mxu0 0.0
      %131 = vmatprep.subr.mxu0 0.0
      %132 = vmatpush1.msra.mxu0 0.0
      %133 = vmatprep.subr.mxu0 0.0
      %134 = vmatpush1.msra.mxu0 0.0
      %135 = vmatprep.subr.mxu0 0.0
      %136 = vmatpush1.msra.mxu0 0.0
      %137 = vmatprep.subr.mxu0 0.0
      %138 = vmatpush1.msra.mxu0 0.0
      %139 = vmatprep.subr.mxu0 0.0
      %140 = vmatpush1.msra.mxu0 0.0
      %141 = vmatprep.subr.mxu0 0.0
      %142 = vmatpush1.msra.mxu0 0.0
      %143 = vmatprep.subr.mxu0 0.0
      %144 = vmatpush1.msra.mxu0 0.0
      %145 = vmatprep.subr.mxu0 0.0
      %146 = vmatpush1.msra.mxu0 0.0
      %147 = vmatprep.subr.mxu0 0.0
      %148 = vmatpush1.msra.mxu0 0.0
      %149 = vmatprep.subr.mxu0 0.0
      %150 = vmatpush1.msra.mxu0 0.0
      %151 = vmatprep.subr.mxu0 0.0
      %152 = vmatpush1.msra.mxu0 0.0
      %153 = vmatprep.subr.mxu0 0.0
      %154 = vmatpush1.msra.mxu0 0.0
      %155 = vmatprep.subr.mxu0 0.0
      %156 = vmatpush1.msra.mxu0 0.0
      %157 = vmatprep.subr.mxu0 0.0
      %158 = vmatpush1.msra.mxu0 0.0
      %159 = vmatprep.subr.mxu0 0.0
      %160 = vmatpush1.msra.mxu0 0.0
      %161 = vmatprep.subr.mxu0 0.0
      %162 = vmatpush1.msra.mxu0 0.0
      %163 = vmatprep.mubr.f32.mxu0 0.0
      %164 = vmatmul.mubr.f32.gmra.mrb[0].mxu0 %v94
      %v165 = vpop.f32.mrb[0].mxu0
      %v166 = vadd.f32 %v90, %v165
      %v167 = vpop.f32.mrb[0].mxu0
      %168 = vdwg.mxu0
      %v169 = vmax.f32 %v166, 0.0
      %v170 = vld [vmem:[%s3] sm:$0xff]
      %v171 = vld [vmem:[%s4] sm:$0x1]
      %v173 = vlaneseq
      %v174 = vshrl.u32 %v173, 7
      %v175 = vsub.s32 0, %v174
      %v176 = vrot.slane %v171, %v175
      %vm178 = vcmask 64512
      %v180 = vsel %vm178, %v169, 0
      %182 = vmatprep.subr.mxu0 0.0
      %183 = vmatpush1.msra.mxu0 %v170
      %184 = vmatprep.subr.mxu0 0.0
      %185 = vmatpush1.msra.mxu0 0.0
      %186 = vmatprep.subr.mxu0 0.0
      %187 = vmatpush1.msra.mxu0 0.0
      %188 = vmatprep.subr.mxu0 0.0
      %189 = vmatpush1.msra.mxu0 0.0
      %190 = vmatprep.subr.mxu0 0.0
      %191 = vmatpush1.msra.mxu0 0.0
      %192 = vmatprep.subr.mxu0 0.0
      %193 = vmatpush1.msra.mxu0 0.0
      %194 = vmatprep.subr.mxu0 0.0
      %195 = vmatpush1.msra.mxu0 0.0
      %196 = vmatprep.subr.mxu0 0.0
      %197 = vmatpush1.msra.mxu0 0.0
      %198 = vmatprep.subr.mxu0 0.0
      %199 = vmatpush1.msra.mxu0 0.0
      %200 = vmatprep.subr.mxu0 0.0
      %201 = vmatpush1.msra.mxu0 0.0
      %202 = vmatprep.subr.mxu0 0.0
      %203 = vmatpush1.msra.mxu0 0.0
      %204 = vmatprep.subr.mxu0 0.0
      %205 = vmatpush1.msra.mxu0 0.0
      %206 = vmatprep.subr.mxu0 0.0
      %207 = vmatpush1.msra.mxu0 0.0
      %208 = vmatprep.subr.mxu0 0.0
      %209 = vmatpush1.msra.mxu0 0.0
      %210 = vmatprep.subr.mxu0 0.0
      %211 = vmatpush1.msra.mxu0 0.0
      %212 = vmatprep.subr.mxu0 0.0
      %213 = vmatpush1.msra.mxu0 0.0
      %214 = vmatprep.subr.mxu0 0.0
      %215 = vmatpush1.msra.mxu0 0.0
      %216 = vmatprep.subr.mxu0 0.0
      %217 = vmatpush1.msra.mxu0 0.0
      %218 = vmatprep.subr.mxu0 0.0
      %219 = vmatpush1.msra.mxu0 0.0
      %220 = vmatprep.subr.mxu0 0.0
      %221 = vmatpush1.msra.mxu0 0.0
      %222 = vmatprep.subr.mxu0 0.0
      %223 = vmatpush1.msra.mxu0 0.0
      %224 = vmatprep.subr.mxu0 0.0
      %225 = vmatpush1.msra.mxu0 0.0
      %226 = vmatprep.subr.mxu0 0.0
      %227 = vmatpush1.msra.mxu0 0.0
      %228 = vmatprep.subr.mxu0 0.0
      %229 = vmatpush1.msra.mxu0 0.0
      %230 = vmatprep.subr.mxu0 0.0
      %231 = vmatpush1.msra.mxu0 0.0
      %232 = vmatprep.subr.mxu0 0.0
      %233 = vmatpush1.msra.mxu0 0.0
      %234 = vmatprep.subr.mxu0 0.0
      %235 = vmatpush1.msra.mxu0 0.0
      %236 = vmatprep.subr.mxu0 0.0
      %237 = vmatpush1.msra.mxu0 0.0
      %238 = vmatprep.subr.mxu0 0.0
      %239 = vmatpush1.msra.mxu0 0.0
      %240 = vmatprep.subr.mxu0 0.0
      %241 = vmatpush1.msra.mxu0 0.0
      %242 = vmatprep.subr.mxu0 0.0
      %243 = vmatpush1.msra.mxu0 0.0
      %244 = vmatprep.subr.mxu0 0.0
      %245 = vmatpush1.msra.mxu0 0.0
      %246 = vmatprep.mubr.f32.mxu0 0.0
      %247 = vmatmul.mubr.f32.gmra.mrb[0].mxu0 %v180
      %v248 = vpop.f32.mrb[0].mxu0
      %v249 = vadd.f32 %v176, %v248
      %v250 = vpop.f32.mrb[0].mxu0
      %251 = vdwg.mxu0
      %v252 = vxor.u32 %v249, 2147483648
      %v253 = vmul.f32 %v252, 1.442695
      %v254 = vpow.pop %v253
      %v255 = vadd.f32 %v254, 1.0
      %v256 = vrcp.pop %v255
      %v257 = vmul.f32 1.0, %v256
      %258 = vst.msk [vmem:[#allocation6] sm:$0x3] %vm77, %v257
    $region33: #{tpu_custom_call.1} parent=1 // pred_fallthru
      _
    // Predicated region
    $region34: #{tpu_custom_call.1} parent=1 // pred_check
      _
    $region35: #{tpu_custom_call.1} parent=1 // pred_check_branch
      %260 = sbr.rel (0) target = $region37
    $region36: #{tpu_custom_call.1} parent=1 // pred_region
      %s262 = ssub.s32 32, 32
      %263 = vsyncadd [#allocation5], %s262
      %s265 = sshll.u32 [#allocation6], 4
      %s266 = int_to_ptr.vmem [resolvable:$true] %s265
      %268 = dma.vmem_to_hbm [thread:$0]  %s266, 32, %s5, [#allocation5]
    $region37: #{tpu_custom_call.1} parent=1 // pred_fallthru
      _
    // Predicated region
    $region38: #{tpu_custom_call.1} parent=1 // pred_check
      _
    $region39: #{tpu_custom_call.1} parent=1 // pred_check_branch
      %270 = sbr.rel (0) target = $region41
    $region40: #{tpu_custom_call.1} parent=1 // pred_region
      %271 = dma.done [#allocation5], 32
    $region41: #{tpu_custom_call.1} parent=1 // pred_fallthru
      _
    %272 = vsyncpa [#allocation4], 1
    %273 = vsyncpa [#allocation5], 1

</llo_original>
